<compile_context>
chip_gen: v7x
topology: tpu7x:2x2x1
jax: 0.10.0
libtpu: 0.0.40
codegen_flags: <defaults>
</compile_context>

<pallas_src>
import functools

import jax
import jax.numpy as jnp
from jax.experimental import pallas as pl
from jax.experimental.pallas import tpu as pltpu

_ROW_W = 7 * 128          # 896 lanes/row; lane % 7 == pose-component index
_SMALL_N_XLA = 4096       # below this a kernel launch is not worth it


def _posenet_partial_kernel(pred_ref, targ_ref, acc_ref):
    """Accumulate |pred - targ| into a resident (8, _ROW_W) f32 partial.

    pred_ref / targ_ref: (TILE_ROWS, _ROW_W) blocks in the inputs' dtype.
    acc_ref: (8, _ROW_W) float32 output; same block index every grid step
    (reduction accumulator).  Zero padding contributes 0 to the sums.
    """
    @pl.when(pl.program_id(0) == 0)
    def _():
        acc_ref[...] = jnp.zeros_like(acc_ref)

    diff = jnp.abs(pred_ref[...].astype(jnp.float32)
                   - targ_ref[...].astype(jnp.float32))
    r, w = diff.shape
    # Fold sublane-tile groups with pure VALU adds (layout-preserving reshape).
    acc_ref[...] += jnp.sum(diff.reshape(r // 8, 8, w), axis=0)


def _round_up(x, m):
    return ((x + m - 1) // m) * m


def _xla_reference(pred, targ, sax_s, saq_s):
    t = jnp.mean(jnp.abs(pred[:, :3] - targ[:, :3]))
    q = jnp.mean(jnp.abs(pred[:, 3:] - targ[:, 3:]))
    return jnp.exp(-sax_s) * t + sax_s + jnp.exp(-saq_s) * q + saq_s


@functools.partial(jax.jit,
                   static_argnames=("max_tile_rows", "use_xla_for_small"))
def posenet_criterion(pred, targ, sax, saq, *, max_tile_rows=1024,
                      use_xla_for_small=False):
    """pred, targ: (N, 7); sax, saq: (1,).  Returns the scalar loss."""
    n, d = pred.shape
    assert d == 7, "PoseNetCriterion expects N x 7 poses"
    sax_s = sax.reshape(()).astype(jnp.float32)
    saq_s = saq.reshape(()).astype(jnp.float32)

    if use_xla_for_small and n <= _SMALL_N_XLA:
        # Fixed costs (padding pass + kernel launch) dominate at tiny N.
        return _xla_reference(pred, targ, sax_s, saq_s)

    total = n * 7
    rows = max(pl.cdiv(total, _ROW_W), 1)
    max_tile_rows = _round_up(max_tile_rows, 8)
    if _round_up(rows, 8) <= max_tile_rows:
        tile_rows = _round_up(rows, 8)          # single block covers everything
        rows_pad = tile_rows
    else:
        tile_rows = max_tile_rows
        rows_pad = _round_up(rows, tile_rows)
    padded_len = rows_pad * _ROW_W

    def _pack(a):
        # Row-major flatten (free) + linear zero-pad; no transpose/relayout
        # and no dtype change -- the DMA moves the inputs' native dtype.
        flat = a.reshape(-1)
        return jnp.pad(flat, (0, padded_len - total)).reshape(rows_pad, _ROW_W)

    pred2 = _pack(pred)
    targ2 = _pack(targ)

    acc = pl.pallas_call(
        _posenet_partial_kernel,
        out_shape=jax.ShapeDtypeStruct((8, _ROW_W), jnp.float32),
        grid_spec=pltpu.PrefetchScalarGridSpec(
            num_scalar_prefetch=0,
            grid=(rows_pad // tile_rows,),
            in_specs=[pl.BlockSpec((tile_rows, _ROW_W), lambda i: (i, 0)),
                      pl.BlockSpec((tile_rows, _ROW_W), lambda i: (i, 0))],
            out_specs=pl.BlockSpec((8, _ROW_W), lambda i: (0, 0)),
        ),
        compiler_params=pltpu.CompilerParams(
            dimension_semantics=("arbitrary",),
            vmem_limit_bytes=48 * 1024 * 1024,
        ),
    )(pred2, targ2)

    # Tiny epilogue on the (8, 896) partial: split lanes by pose component
    # (lane % 7 < 3 -> translation), take means, apply exp weighting.
    per_lane = jnp.sum(acc, axis=0)                        # (896,)
    is_t = (jnp.arange(_ROW_W) % 7) < 3
    t_sum = jnp.sum(jnp.where(is_t, per_lane, 0.0))
    q_sum = jnp.sum(per_lane) - t_sum
    t_mean = t_sum / jnp.float32(n * 3)
    q_mean = q_sum / jnp.float32(n * 4)
    return (jnp.exp(-sax_s) * t_mean + sax_s
            + jnp.exp(-saq_s) * q_mean + saq_s)


if __name__ == "__main__":
    key = jax.random.PRNGKey(0)
    k1, k2, k3, k4 = jax.random.split(key, 4)

    # Module parameters (per __init__: shape (1,) each), deterministic.
    sax = jnp.array([0.0], dtype=jnp.float32)
    saq = jnp.array([-3.0], dtype=jnp.float32)

    # Small case matching the module's N x 7 convention (single-block Pallas path).
    N = 8
    pred = jax.random.normal(k1, (N, 7), dtype=jnp.float32)
    targ = jax.random.normal(k2, (N, 7), dtype=jnp.float32)
    loss = posenet_criterion(pred, targ, sax, saq)          # Pallas kernel path
    jax.block_until_ready(loss)
    ref = _xla_reference(pred, targ, sax[0], saq[0])
    assert jnp.allclose(loss, ref, rtol=1e-5, atol=1e-5), (loss, ref)

    # Multi-block path: small max_tile_rows forces a >1-step reduction grid.
    N2 = 2048
    pred2 = jax.random.normal(k3, (N2, 7), dtype=jnp.float32)
    targ2 = jax.random.normal(k4, (N2, 7), dtype=jnp.float32)
    loss2 = posenet_criterion(pred2, targ2, sax, saq, max_tile_rows=8)
    jax.block_until_ready(loss2)
    ref2 = _xla_reference(pred2, targ2, sax[0], saq[0])
    assert jnp.allclose(loss2, ref2, rtol=1e-5, atol=1e-5), (loss2, ref2)

    # Small-N XLA fast path (no kernel launch) must agree as well.
    loss3 = posenet_criterion(pred, targ, sax, saq, use_xla_for_small=True)
    jax.block_until_ready(loss3)
    assert jnp.allclose(loss3, ref, rtol=1e-5, atol=1e-5), (loss3, ref)

    print("KERNEL_OK")
</pallas_src>

<mosaic_0001>
module attributes {stable_mosaic.version = 11 : i64} {
  func.func @_posenet_partial_kernel(%arg0: i32, %arg1: memref<8x896xf32, #tpu.memory_space<vmem>>, %arg2: memref<8x896xf32, #tpu.memory_space<vmem>>, %arg3: memref<8x896xf32, #tpu.memory_space<vmem>>) attributes {dimension_semantics = [#tpu.dimension_semantics<arbitrary>], iteration_bounds = array<i64: 1>, scalar_prefetch = 0 : i64, scratch_operands = 0 : i64, tpu.core_type = #tpu.core_type<tc>, window_params = [{transform_indices = @transform_0, window_bounds = array<i64: 8, 896>}, {transform_indices = @transform_1, window_bounds = array<i64: 8, 896>}, {pipeline_mode = #tpu.pipeline_mode<synchronous>, transform_indices = @transform_2, window_bounds = array<i64: 8, 896>}]} {
    %c0_i32 = arith.constant 0 : i32
    %0 = arith.cmpi eq, %arg0, %c0_i32 : i32
    %1 = arith.extui %0 : i1 to i32
    %c0_i32_0 = arith.constant 0 : i32
    %2 = arith.cmpi ne, %1, %c0_i32_0 : i32
    scf.if %2 {
      %cst_8 = arith.constant 0.000000e+00 : f32
      %12 = vector.broadcast %cst_8 : f32 to vector<8x896xf32>
      %c0_9 = arith.constant 0 : index
      %c0_10 = arith.constant 0 : index
      %13 = vector.load %arg3[%c0_9, %c0_10] : memref<8x896xf32, #tpu.memory_space<vmem>>, vector<8x896xf32>
      tpu.vector_store %arg3[%c0_9, %c0_10], %12 {strides = array<i32>} : memref<8x896xf32, #tpu.memory_space<vmem>>, vector<8x896xf32>,
    } else {
    }
    %c0 = arith.constant 0 : index
    %c0_1 = arith.constant 0 : index
    %3 = vector.load %arg1[%c0, %c0_1] : memref<8x896xf32, #tpu.memory_space<vmem>>, vector<8x896xf32>
    %c0_2 = arith.constant 0 : index
    %c0_3 = arith.constant 0 : index
    %4 = vector.load %arg2[%c0_2, %c0_3] : memref<8x896xf32, #tpu.memory_space<vmem>>, vector<8x896xf32>
    %5 = arith.subf %3, %4 : vector<8x896xf32>
    %6 = math.absf %5 : vector<8x896xf32>
    %c0_4 = arith.constant 0 : index
    %c0_5 = arith.constant 0 : index
    %7 = vector.load %arg3[%c0_4, %c0_5] : memref<8x896xf32, #tpu.memory_space<vmem>>, vector<8x896xf32>
    %8 = vector.shape_cast %6 : vector<8x896xf32> to vector<1x8x896xf32>
    %cst = arith.constant dense<0.000000e+00> : vector<8x896xf32>
    %9 = vector.multi_reduction <add>, %8, %cst [0] : vector<1x8x896xf32> to vector<8x896xf32>
    %10 = arith.addf %7, %9 : vector<8x896xf32>
    %c0_6 = arith.constant 0 : index
    %c0_7 = arith.constant 0 : index
    %11 = vector.load %arg3[%c0_6, %c0_7] : memref<8x896xf32, #tpu.memory_space<vmem>>, vector<8x896xf32>
    tpu.vector_store %arg3[%c0_6, %c0_7], %10 {strides = array<i32>} : memref<8x896xf32, #tpu.memory_space<vmem>>, vector<8x896xf32>,
    return
  }
  func.func @transform_0(%arg0: i32) -> (i32, i32) {
    %c0_i32 = arith.constant 0 : i32
    %c0_i32_0 = arith.constant 0 : i32
    return %arg0, %c0_i32 : i32, i32
  }
  func.func @transform_1(%arg0: i32) -> (i32, i32) {
    %c0_i32 = arith.constant 0 : i32
    %c0_i32_0 = arith.constant 0 : i32
    return %arg0, %c0_i32 : i32, i32
  }
  func.func @transform_2(%arg0: i32) -> (i32, i32) {
    %c0_i32 = arith.constant 0 : i32
    %c0_i32_0 = arith.constant 0 : i32
    %c0_i32_1 = arith.constant 0 : i32
    return %c0_i32, %c0_i32_0 : i32, i32
  }
}

</mosaic_0001>

<llo_original>
// kernel: posenet_criterion.1
$region0: #{posenet_criterion.1}
  #allocation0 [shape = 'u32[]', space=smem, size = 0x4, offset = 0x4, fixed_abs, tag = 'smem constant byte address 0x4 - core index']
  #allocation1 [shape = 'u32[144,128]{1,0:T(1,128)}', space=vmem, size = 0x12000, scoped, tag = 'internal scratch']
  %s0 = inlined_call_operand.vmem [shape: f32[8,896], index: 0, kind: input, shape index: {}]
  %s1 = inlined_call_operand.vmem [shape: f32[8,896], index: 1, kind: input, shape index: {}]
  %s2 = inlined_call_operand.vmem [shape: f32[8,896], index: 2, kind: output, shape index: {}]
  %s3 = sld [smem:[#allocation0]]
  $region22: #{posenet_criterion.1} parent=0
    _
  %s5 = ssub.s32 1, %s3
  %s6 = scalar_select 0, %s5, %s3
  // Predicated region
  $region2: #{posenet_criterion.1} parent=0 // pred_check
    _
  $region3: #{posenet_criterion.1} parent=0 // pred_check_branch
    %8 = sbr.rel (0) target = $region5
  $region4: #{posenet_criterion.1} parent=0 // pred_region
    _
  $region5: #{posenet_criterion.1} parent=0 // pred_fallthru
    _
  // Predicated region
  $region6: #{posenet_criterion.1} parent=0 // pred_check
    _
  $region7: #{posenet_criterion.1} parent=0 // pred_check_branch
    %10 = sbr.rel (0) target = $region9
  $region8: #{posenet_criterion.1} parent=0 // pred_region
    _
  $region9: #{posenet_criterion.1} parent=0 // pred_fallthru
    _
  %p11 = scmp.eq.s32.totalorder 0, 0
  // Predicated region
  $region10: #{posenet_criterion.1} parent=0 // pred_check
    %p12 = pneg %p11
  $region11: #{posenet_criterion.1} parent=0 // pred_check_branch
    %14 = sbr.rel (%p12) target = $region13
  $region12: #{posenet_criterion.1} parent=0 // pred_region
    %15 = vst [vmem:[%s2] sm:$0xff] 0.0
    %16 = vst [vmem:[%s2 + $0x8] sm:$0xff] 0.0
    %17 = vst [vmem:[%s2 + $0x10] sm:$0xff] 0.0
    %18 = vst [vmem:[%s2 + $0x18] sm:$0xff] 0.0
    %19 = vst [vmem:[%s2 + $0x20] sm:$0xff] 0.0
    %20 = vst [vmem:[%s2 + $0x28] sm:$0xff] 0.0
    %21 = vst [vmem:[%s2 + $0x30] sm:$0xff] 0.0
  $region13: #{posenet_criterion.1} parent=0 // pred_fallthru
    _
  %v22 = vld [vmem:[%s0] sm:$0xff]
  %v23 = vld [vmem:[%s0 + $0x8] sm:$0xff]
  %v24 = vld [vmem:[%s0 + $0x10] sm:$0xff]
  %v25 = vld [vmem:[%s0 + $0x18] sm:$0xff]
  %v26 = vld [vmem:[%s0 + $0x20] sm:$0xff]
  %v27 = vld [vmem:[%s0 + $0x28] sm:$0xff]
  %v28 = vld [vmem:[%s0 + $0x30] sm:$0xff]
  %v29 = vld [vmem:[%s1] sm:$0xff]
  %v30 = vld [vmem:[%s1 + $0x8] sm:$0xff]
  %v31 = vld [vmem:[%s1 + $0x10] sm:$0xff]
  %v32 = vld [vmem:[%s1 + $0x18] sm:$0xff]
  %v33 = vld [vmem:[%s1 + $0x20] sm:$0xff]
  %v34 = vld [vmem:[%s1 + $0x28] sm:$0xff]
  %v35 = vld [vmem:[%s1 + $0x30] sm:$0xff]
  %v36 = vsub.f32 %v22, %v29
  %v37 = vsub.f32 %v23, %v30
  %v38 = vsub.f32 %v24, %v31
  %v39 = vsub.f32 %v25, %v32
  %v40 = vsub.f32 %v26, %v33
  %v41 = vsub.f32 %v27, %v34
  %v42 = vsub.f32 %v28, %v35
  %v43 = vand.u32 2147483647, %v36
  %v44 = vand.u32 2147483647, %v37
  %v45 = vand.u32 2147483647, %v38
  %v46 = vand.u32 2147483647, %v39
  %v47 = vand.u32 2147483647, %v40
  %v48 = vand.u32 2147483647, %v41
  %v49 = vand.u32 2147483647, %v42
  %v50 = vld [vmem:[%s2] sm:$0xff]
  %v51 = vld [vmem:[%s2 + $0x8] sm:$0xff]
  %v52 = vld [vmem:[%s2 + $0x10] sm:$0xff]
  %v53 = vld [vmem:[%s2 + $0x18] sm:$0xff]
  %v54 = vld [vmem:[%s2 + $0x20] sm:$0xff]
  %v55 = vld [vmem:[%s2 + $0x28] sm:$0xff]
  %v56 = vld [vmem:[%s2 + $0x30] sm:$0xff]
  %v57 = vadd.f32 %v43, 0.0
  %v58 = vadd.f32 %v44, 0.0
  %v59 = vadd.f32 %v45, 0.0
  %v60 = vadd.f32 %v46, 0.0
  %v61 = vadd.f32 %v47, 0.0
  %v62 = vadd.f32 %v48, 0.0
  %v63 = vadd.f32 %v49, 0.0
  %v64 = vadd.f32 %v50, %v57
  %v65 = vadd.f32 %v51, %v58
  %v66 = vadd.f32 %v52, %v59
  %v67 = vadd.f32 %v53, %v60
  %v68 = vadd.f32 %v54, %v61
  %v69 = vadd.f32 %v55, %v62
  %v70 = vadd.f32 %v56, %v63
  %71 = vst [vmem:[%s2] sm:$0xff] %v64
  %72 = vst [vmem:[%s2 + $0x8] sm:$0xff] %v65
  %73 = vst [vmem:[%s2 + $0x10] sm:$0xff] %v66
  %74 = vst [vmem:[%s2 + $0x18] sm:$0xff] %v67
  %75 = vst [vmem:[%s2 + $0x20] sm:$0xff] %v68
  %76 = vst [vmem:[%s2 + $0x28] sm:$0xff] %v69
  %77 = vst [vmem:[%s2 + $0x30] sm:$0xff] %v70
  // Predicated region
  $region14: #{posenet_criterion.1} parent=0 // pred_check
    _
  $region15: #{posenet_criterion.1} parent=0 // pred_check_branch
    %79 = sbr.rel (0) target = $region17
  $region16: #{posenet_criterion.1} parent=0 // pred_region
    _
  $region17: #{posenet_criterion.1} parent=0 // pred_fallthru
    _
  // Predicated region
  $region18: #{posenet_criterion.1} parent=0 // pred_check
    _
  $region19: #{posenet_criterion.1} parent=0 // pred_check_branch
    %81 = sbr.rel (0) target = $region21
  $region20: #{posenet_criterion.1} parent=0 // pred_region
    _
  $region21: #{posenet_criterion.1} parent=0 // pred_fallthru
    _

</llo_original>
